<compile_context>
chip_gen: v7x
topology: tpu7x:2x2x1
jax: 0.10.0
libtpu: 0.0.40
codegen_flags: <defaults>
</compile_context>

<pallas_src>
import functools

import jax
import jax.numpy as jnp
from jax.experimental import pallas as pl
from jax.experimental.pallas import tpu as pltpu


def _round_up(x, m):
    return ((x + m - 1) // m) * m


def _loss_kernel(disp_ref, model_ref, out_ref, *, nbp, lm_w, du_w):
    # disp_ref : (bt, nbp)       zero-padded displacement vectors for this batch tile
    # model_ref: (nbp + 8, 384)  packed constants:
    #              rows 0..nbp-1 : shapedirs, col c*128+l = shapedirs[lm_inds[l], c, b]
    #              row  nbp      : reference_shape (lanes 0..NB-1)
    #              row  nbp+1    : v_template[lm_inds] laid out per coordinate block
    #              row  nbp+2    : reference_lm laid out per coordinate block
    # out_ref  : (bt, 128)       per-row loss broadcast across lanes
    disp = disp_ref[...]                                          # (bt, nbp) f32
    ref_shape = model_ref[nbp:nbp + 1, 0:nbp]                     # (1, nbp)
    betas = disp + ref_shape                                      # (bt, nbp)

    sd = model_ref[0:nbp, :]                                      # (nbp, 384)
    # Single MXU matmul: blend-shape offsets for all 3 coordinates at once.
    off = jnp.dot(betas, sd, preferred_element_type=jnp.float32)  # (bt, 384)

    vt = model_ref[nbp + 1:nbp + 2, :]                            # (1, 384)
    rlm = model_ref[nbp + 2:nbp + 3, :]                           # (1, 384)
    d = rlm - (vt + off)                                          # (bt, 384); padded lanes exactly 0
    d2 = d * d

    # Per-landmark squared distance: sum x/y/z coordinate blocks (128-lane aligned slices).
    sq = d2[:, 0:128] + d2[:, 128:256] + d2[:, 256:384]           # (bt, 128)
    # TODO(synk): no epsilon inside sqrt (matches torch.norm forward); fine for fwd-only.
    dist_sum = jnp.sum(jnp.sqrt(sq), axis=1, keepdims=True)       # (bt, 1)

    disp_norm = jnp.sqrt(jnp.sum(disp * disp, axis=1, keepdims=True))  # (bt, 1)
    unit_pen = jnp.abs(disp_norm - 1.0)

    loss = lm_w * dist_sum + du_w * unit_pen                      # (bt, 1)
    out_ref[...] = jnp.broadcast_to(loss, out_ref.shape)          # lane-dense store


def pack_model(reference_shape, shapedirs, v_template, lm_inds, reference_lm, *, nbp=16):
    """Host-side glue: pack all constant tensors into one (nbp+8, 384) f32 slab."""
    NB = reference_shape.shape[-1]
    L = int(lm_inds.shape[0])
    assert NB <= nbp and nbp % 8 == 0 and L <= 128
    model = jnp.zeros((nbp + 8, 3 * 128), jnp.float32)
    sd_lm = shapedirs[lm_inds]                                       # (L, 3, NB)
    sd_mat = jnp.transpose(sd_lm, (2, 1, 0)).astype(jnp.float32)     # (NB, 3, L)
    vt_lm = v_template[lm_inds].astype(jnp.float32)                  # (L, 3)
    rlm = reference_lm.astype(jnp.float32)                           # (L, 3)
    for c in range(3):
        model = model.at[0:NB, c * 128:c * 128 + L].set(sd_mat[:, c, :])
        model = model.at[nbp + 1, c * 128:c * 128 + L].set(vt_lm[:, c])
        model = model.at[nbp + 2, c * 128:c * 128 + L].set(rlm[:, c])
    model = model.at[nbp, 0:NB].set(reference_shape[0].astype(jnp.float32))
    return model


def pallas_loss(displacement_batch, model, *, lm_dist_weight, displacement_unit_weight,
                nbp=16, bt=None):
    """Compute the Loss forward for a batch of displacement vectors (B, NB) -> (B,)."""
    B, NB = displacement_batch.shape
    assert NB <= nbp
    if bt is None:
        bt = min(128, _round_up(B, 8))      # bigger tiles amortize per-step overhead
    B_pad = _round_up(B, bt)
    disp_padded = jnp.zeros((B_pad, nbp), jnp.float32).at[:B, :NB].set(
        displacement_batch.astype(jnp.float32))

    kernel = functools.partial(_loss_kernel, nbp=nbp,
                               lm_w=float(lm_dist_weight),
                               du_w=float(displacement_unit_weight))
    out = pl.pallas_call(
        kernel,
        out_shape=jax.ShapeDtypeStruct((B_pad, 128), jnp.float32),
        grid=(B_pad // bt,),
        in_specs=[
            pl.BlockSpec((bt, nbp), lambda i: (i, 0)),          # batched displacements
            pl.BlockSpec(model.shape, lambda i: (0, 0)),        # constants, VMEM-resident
        ],
        out_specs=pl.BlockSpec((bt, 128), lambda i: (i, 0)),
        compiler_params=pltpu.CompilerParams(
            dimension_semantics=("parallel",)),
    )(disp_padded, model)
    return out[:B, 0]


def reference_loss(displacement_vector, reference_shape, shapedirs, v_template,
                   lm_inds, reference_lm, lm_dist_weight, displacement_unit_weight):
    """Pure-JAX reference mirroring the PyTorch forward (zero-pose SMPL)."""
    betas = reference_shape + displacement_vector                        # (1, NB)
    verts = v_template + jnp.einsum('l,vcl->vc', betas[0], shapedirs)    # (V, 3)
    displaced_lm = verts[lm_inds]                                        # (L, 3)
    sum_of_lm_distances = jnp.sum(
        jnp.linalg.norm(reference_lm - displaced_lm, axis=1))
    distance_from_unit_norm = jnp.abs(jnp.linalg.norm(displacement_vector) - 1.0)
    return (lm_dist_weight * sum_of_lm_distances
            + displacement_unit_weight * distance_from_unit_norm)


if __name__ == "__main__":
    NUM_BETAS = 10   # SMPL num_betas
    V = 64           # synthetic vertex count (real SMPL has 6890)
    L = 8            # number of landmarks
    B = 8            # batch of candidate displacement vectors

    key = jax.random.PRNGKey(0)
    k1, k2, k3, k4, k5 = jax.random.split(key, 5)

    # Deterministic synthetic "body model" parameters.
    v_template = jax.random.normal(k1, (V, 3), dtype=jnp.float32)
    shapedirs = 0.1 * jax.random.normal(k2, (V, 3, NUM_BETAS), dtype=jnp.float32)

    lm_inds = jnp.arange(0, V, V // L, dtype=jnp.int32)[:L]              # fixed landmark indices
    reference_shape = 0.5 * jax.random.normal(k3, (1, NUM_BETAS), dtype=jnp.float32)
    reference_lm = jax.random.normal(k4, (L, 3), dtype=jnp.float32)
    displacement_batch = jax.random.normal(k5, (B, NUM_BETAS), dtype=jnp.float32)

    lm_dist_weight = 1.0
    displacement_unit_weight = 0.5

    # Host glue: one packed constant slab, then one batched kernel call.
    model = pack_model(reference_shape, shapedirs, v_template, lm_inds, reference_lm, nbp=16)
    losses = pallas_loss(displacement_batch, model,
                         lm_dist_weight=lm_dist_weight,
                         displacement_unit_weight=displacement_unit_weight)
    losses = jax.block_until_ready(losses)

    ref = jnp.stack([
        reference_loss(displacement_batch[i:i + 1], reference_shape, shapedirs,
                       v_template, lm_inds, reference_lm,
                       lm_dist_weight, displacement_unit_weight)
        for i in range(B)
    ])
    ref = jax.block_until_ready(ref)

    assert losses.shape == (B,)
    assert jnp.allclose(losses, ref, rtol=1e-4, atol=1e-4), (losses, ref)
    print("KERNEL_OK")
</pallas_src>

<mosaic_0001>
module attributes {stable_mosaic.version = 11 : i64} {
  func.func @_loss_kernel(%arg0: i32, %arg1: memref<8x16xf32, #tpu.memory_space<vmem>>, %arg2: memref<24x384xf32, #tpu.memory_space<vmem>>, %arg3: memref<8x128xf32, #tpu.memory_space<vmem>>) attributes {dimension_semantics = [#tpu.dimension_semantics<parallel>], iteration_bounds = array<i64: 1>, scalar_prefetch = 0 : i64, scratch_operands = 0 : i64, tpu.core_type = #tpu.core_type<tc>, window_params = [{transform_indices = @transform_0, window_bounds = array<i64: 8, 16>}, {pipeline_mode = #tpu.pipeline_mode<synchronous>, transform_indices = @transform_1, window_bounds = array<i64: 24, 384>}, {transform_indices = @transform_2, window_bounds = array<i64: 8, 128>}]} {
    %c0 = arith.constant 0 : index
    %c0_0 = arith.constant 0 : index
    %0 = vector.load %arg1[%c0, %c0_0] : memref<8x16xf32, #tpu.memory_space<vmem>>, vector<8x16xf32>
    %c16 = arith.constant 16 : index
    %c0_1 = arith.constant 0 : index
    %1 = vector.load %arg2[%c16, %c0_1] : memref<24x384xf32, #tpu.memory_space<vmem>>, vector<1x16xf32>
    %2 = vector.broadcast %1 : vector<1x16xf32> to vector<8x16xf32>
    %3 = arith.addf %0, %2 : vector<8x16xf32>
    %c0_2 = arith.constant 0 : index
    %c0_3 = arith.constant 0 : index
    %4 = vector.load %arg2[%c0_2, %c0_3] : memref<24x384xf32, #tpu.memory_space<vmem>>, vector<16x384xf32>
    %cst = arith.constant dense<0.000000e+00> : vector<8x384xf32>
    %5 = tpu.matmul %3, %4, %cst {dimension_numbers = #tpu.dot_dimension_numbers<[1], [0], [0], [1], [0, 0, 1, 1], [], []>} : vector<8x16xf32>, vector<16x384xf32>, vector<8x384xf32> -> vector<8x384xf32>
    %c17 = arith.constant 17 : index
    %c0_4 = arith.constant 0 : index
    %6 = vector.load %arg2[%c17, %c0_4] : memref<24x384xf32, #tpu.memory_space<vmem>>, vector<1x384xf32>
    %c18 = arith.constant 18 : index
    %c0_5 = arith.constant 0 : index
    %7 = vector.load %arg2[%c18, %c0_5] : memref<24x384xf32, #tpu.memory_space<vmem>>, vector<1x384xf32>
    %8 = vector.broadcast %6 : vector<1x384xf32> to vector<8x384xf32>
    %9 = arith.addf %8, %5 : vector<8x384xf32>
    %10 = vector.broadcast %7 : vector<1x384xf32> to vector<8x384xf32>
    %11 = arith.subf %10, %9 : vector<8x384xf32>
    %12 = arith.mulf %11, %11 : vector<8x384xf32>
    %13 = vector.extract_strided_slice %12 {offsets = [0, 0], sizes = [8, 128], strides = [1, 1]} : vector<8x384xf32> to vector<8x128xf32>
    %14 = vector.extract_strided_slice %12 {offsets = [0, 128], sizes = [8, 128], strides = [1, 1]} : vector<8x384xf32> to vector<8x128xf32>
    %15 = arith.addf %13, %14 : vector<8x128xf32>
    %16 = vector.extract_strided_slice %12 {offsets = [0, 256], sizes = [8, 128], strides = [1, 1]} : vector<8x384xf32> to vector<8x128xf32>
    %17 = arith.addf %15, %16 : vector<8x128xf32>
    %18 = math.sqrt %17 : vector<8x128xf32>
    %cst_6 = arith.constant dense<0.000000e+00> : vector<8xf32>
    %19 = vector.multi_reduction <add>, %18, %cst_6 [1] : vector<8x128xf32> to vector<8xf32>
    %20 = vector.shape_cast %19 : vector<8xf32> to vector<8x1xf32>
    %21 = arith.mulf %0, %0 : vector<8x16xf32>
    %cst_7 = arith.constant dense<0.000000e+00> : vector<8xf32>
    %22 = vector.multi_reduction <add>, %21, %cst_7 [1] : vector<8x16xf32> to vector<8xf32>
    %23 = vector.shape_cast %22 : vector<8xf32> to vector<8x1xf32>
    %24 = math.sqrt %23 : vector<8x1xf32>
    %cst_8 = arith.constant 1.000000e+00 : f32
    %25 = vector.broadcast %cst_8 : f32 to vector<8x1xf32>
    %26 = arith.subf %24, %25 : vector<8x1xf32>
    %27 = math.absf %26 : vector<8x1xf32>
    %cst_9 = arith.constant 1.000000e+00 : f32
    %28 = vector.broadcast %cst_9 : f32 to vector<8x1xf32>
    %29 = arith.mulf %28, %20 : vector<8x1xf32>
    %cst_10 = arith.constant 5.000000e-01 : f32
    %30 = vector.broadcast %cst_10 : f32 to vector<8x1xf32>
    %31 = arith.mulf %30, %27 : vector<8x1xf32>
    %32 = arith.addf %29, %31 : vector<8x1xf32>
    %33 = vector.shape_cast %32 : vector<8x1xf32> to vector<8x1xf32>
    %34 = vector.broadcast %33 : vector<8x1xf32> to vector<8x128xf32>
    %c0_11 = arith.constant 0 : index
    %c0_12 = arith.constant 0 : index
    %35 = vector.load %arg3[%c0_11, %c0_12] : memref<8x128xf32, #tpu.memory_space<vmem>>, vector<8x128xf32>
    tpu.vector_store %arg3[%c0_11, %c0_12], %34 {strides = array<i32>} : memref<8x128xf32, #tpu.memory_space<vmem>>, vector<8x128xf32>,
    return
  }
  func.func @transform_0(%arg0: i32) -> (i32, i32) {
    %c0_i32 = arith.constant 0 : i32
    %c0_i32_0 = arith.constant 0 : i32
    return %arg0, %c0_i32 : i32, i32
  }
  func.func @transform_1(%arg0: i32) -> (i32, i32) {
    %c0_i32 = arith.constant 0 : i32
    %c0_i32_0 = arith.constant 0 : i32
    %c0_i32_1 = arith.constant 0 : i32
    return %c0_i32, %c0_i32_0 : i32, i32
  }
  func.func @transform_2(%arg0: i32) -> (i32, i32) {
    %c0_i32 = arith.constant 0 : i32
    %c0_i32_0 = arith.constant 0 : i32
    return %arg0, %c0_i32 : i32, i32
  }
}

</mosaic_0001>

<llo_original>
// kernel: tpu_custom_call.1
$region0: #{tpu_custom_call.1}
  #allocation0 [shape = 'u32[]', space=smem, size = 0x4, offset = 0x4, fixed_abs, tag = 'smem constant byte address 0x4 - core index']
  #allocation1 [shape = 'u32[144,128]{1,0:T(1,128)}', space=vmem, size = 0x12000, scoped, tag = 'internal scratch']
  %s0 = inlined_call_operand.hbm [shape: f32[8,16], index: 0, kind: input, shape index: {}]
  %s1 = inlined_call_operand.hbm [shape: f32[24,384], index: 1, kind: input, shape index: {}]
  %s2 = inlined_call_operand.hbm [shape: f32[8,128], index: 2, kind: output, shape index: {}]
  %s3 = sld [smem:[#allocation0]]
  $region26: #{tpu_custom_call.1} parent=0
    _
  %s5 = ssub.s32 1, %s3
  %s6 = scalar_select 0, %s5, %s3
  $region1: #{tpu_custom_call.1} parent=0
    #allocation2 [shape = 'u8[4096]{0}', space=vmem, size = 0x1000, scoped, tag = 'input window, operand 0, single buffered']
    #allocation3 [shape = 's32[1]{0}', space=sflag, size = 0x4, scoped, tag = 'scoped memory for tpu_custom_call.1']
    #allocation4 [shape = 's32[1]{0}', space=sflag, size = 0x4, scoped, tag = 'scoped memory for tpu_custom_call.1']
    #allocation5 [shape = 'u8[36864]{0}', space=vmem, size = 0x9000, scoped, tag = 'input window, operand 1, single buffered']
    #allocation6 [shape = 's32[1]{0}', space=sflag, size = 0x4, scoped, tag = 'scoped memory for tpu_custom_call.1']
    #allocation7 [shape = 'u8[4096]{0}', space=vmem, size = 0x1000, scoped, tag = 'output window, operand 0, single buffered']
    %7 = vsyncpa [#allocation3], 0
    %8 = vsyncpa [#allocation6], 0
    %9 = vsyncpa [#allocation4], 0
    // Predicated region
    $region2: #{tpu_custom_call.1} parent=1 // pred_check
      _
    $region3: #{tpu_custom_call.1} parent=1 // pred_check_branch
      %11 = sbr.rel (0) target = $region5
    $region4: #{tpu_custom_call.1} parent=1 // pred_region
      %s13 = ssub.s32 128, 128
      %14 = vsyncadd [#allocation3], %s13
      %s16 = sshll.u32 [#allocation2], 4
      %s17 = int_to_ptr.vmem [resolvable:$true] %s16
      %19 = dma.hbm_to_vmem [thread:$0]  %s0, 128, %s17, [#allocation3]
    $region5: #{tpu_custom_call.1} parent=1 // pred_fallthru
      _
    // Predicated region
    $region6: #{tpu_custom_call.1} parent=1 // pred_check
      _
    $region7: #{tpu_custom_call.1} parent=1 // pred_check_branch
      %21 = sbr.rel (0) target = $region9
    $region8: #{tpu_custom_call.1} parent=1 // pred_region
      %s23 = ssub.s32 1152, 1152
      %24 = vsyncadd [#allocation6], %s23
      %s25 = sshll.u32 [#allocation5], 4
      %s26 = int_to_ptr.vmem [resolvable:$true] %s25
      %31 = dma.hbm_to_vmem [thread:$0]  %s1, 1152, %s26, [#allocation6], 384, 384, 24
    $region9: #{tpu_custom_call.1} parent=1 // pred_fallthru
      _
    // Predicated region
    $region10: #{tpu_custom_call.1} parent=1 // pred_check
      _
    $region11: #{tpu_custom_call.1} parent=1 // pred_check_branch
      %33 = sbr.rel (0) target = $region13
    $region12: #{tpu_custom_call.1} parent=1 // pred_region
      %34 = dma.done [#allocation3], 128
    $region13: #{tpu_custom_call.1} parent=1 // pred_fallthru
      _
    // Predicated region
    $region14: #{tpu_custom_call.1} parent=1 // pred_check
      _
    $region15: #{tpu_custom_call.1} parent=1 // pred_check_branch
      %36 = sbr.rel (0) target = $region17
    $region16: #{tpu_custom_call.1} parent=1 // pred_region
      %37 = dma.done [#allocation6], 1152
    $region17: #{tpu_custom_call.1} parent=1 // pred_fallthru
      _
    %v38 = vld [vmem:[#allocation2] sm:$0xff]
    %v39 = vld [vmem:[#allocation5 + $0x30] ss:$0 sm:$0xff]
    %v40 = vadd.f32 %v38, %v39
    %v41 = vld [vmem:[#allocation5] sm:$0xff]
    %v42 = vld [vmem:[#allocation5 + $0x8] sm:$0xff]
    %v43 = vld [vmem:[#allocation5 + $0x10] sm:$0xff]
    %v44 = vld [vmem:[#allocation5 + $0x18] sm:$0xff]
    %v45 = vld [vmem:[#allocation5 + $0x20] sm:$0xff]
    %v46 = vld [vmem:[#allocation5 + $0x28] sm:$0xff]
    %vm47 = vcmask 130048
    %v49 = vsel %vm47, %v40, 0
    %51 = vmatprep.subr.mxu0 %v42
    %52 = vmatpush1.msra.mxu0 %v41
    %53 = vmatprep.subr.mxu0 %v45
    %54 = vmatpush1.msra.mxu0 %v44
    %55 = vmatprep.subr.mxu0 0.0
    %56 = vmatpush1.msra.mxu0 0.0
    %57 = vmatprep.subr.mxu0 0.0
    %58 = vmatpush1.msra.mxu0 0.0
    %59 = vmatprep.subr.mxu0 0.0
    %60 = vmatpush1.msra.mxu0 0.0
    %61 = vmatprep.subr.mxu0 0.0
    %62 = vmatpush1.msra.mxu0 0.0
    %63 = vmatprep.subr.mxu0 0.0
    %64 = vmatpush1.msra.mxu0 0.0
    %65 = vmatprep.subr.mxu0 0.0
    %66 = vmatpush1.msra.mxu0 0.0
    %67 = vmatprep.subr.mxu0 0.0
    %68 = vmatpush1.msra.mxu0 0.0
    %69 = vmatprep.subr.mxu0 0.0
    %70 = vmatpush1.msra.mxu0 0.0
    %71 = vmatprep.subr.mxu0 0.0
    %72 = vmatpush1.msra.mxu0 0.0
    %73 = vmatprep.subr.mxu0 0.0
    %74 = vmatpush1.msra.mxu0 0.0
    %75 = vmatprep.subr.mxu0 0.0
    %76 = vmatpush1.msra.mxu0 0.0
    %77 = vmatprep.subr.mxu0 0.0
    %78 = vmatpush1.msra.mxu0 0.0
    %79 = vmatprep.subr.mxu0 0.0
    %80 = vmatpush1.msra.mxu0 0.0
    %81 = vmatprep.subr.mxu0 0.0
    %82 = vmatpush1.msra.mxu0 0.0
    %83 = vmatprep.subr.mxu0 0.0
    %84 = vmatpush1.msra.mxu0 0.0
    %85 = vmatprep.subr.mxu0 0.0
    %86 = vmatpush1.msra.mxu0 0.0
    %87 = vmatprep.subr.mxu0 0.0
    %88 = vmatpush1.msra.mxu0 0.0
    %89 = vmatprep.subr.mxu0 0.0
    %90 = vmatpush1.msra.mxu0 0.0
    %91 = vmatprep.subr.mxu0 0.0
    %92 = vmatpush1.msra.mxu0 0.0
    %93 = vmatprep.subr.mxu0 0.0
    %94 = vmatpush1.msra.mxu0 0.0
    %95 = vmatprep.subr.mxu0 0.0
    %96 = vmatpush1.msra.mxu0 0.0
    %97 = vmatprep.subr.mxu0 0.0
    %98 = vmatpush1.msra.mxu0 0.0
    %99 = vmatprep.subr.mxu0 0.0
    %100 = vmatpush1.msra.mxu0 0.0
    %101 = vmatprep.subr.mxu0 0.0
    %102 = vmatpush1.msra.mxu0 0.0
    %103 = vmatprep.subr.mxu0 0.0
    %104 = vmatpush1.msra.mxu0 0.0
    %105 = vmatprep.subr.mxu0 0.0
    %106 = vmatpush1.msra.mxu0 0.0
    %107 = vmatprep.subr.mxu0 0.0
    %108 = vmatpush1.msra.mxu0 0.0
    %109 = vmatprep.subr.mxu0 0.0
    %110 = vmatpush1.msra.mxu0 0.0
    %111 = vmatprep.subr.mxu0 0.0
    %112 = vmatpush1.msra.mxu0 0.0
    %113 = vmatprep.subr.mxu0 0.0
    %114 = vmatpush1.msra.mxu0 0.0
    %115 = vmatprep.mubr.f32.mxu0 0.0
    %116 = vmatmul.mubr.f32.gmra.mrb[0].mxu0 %v49
    %v117 = vpop.f32.mrb[0].mxu0
    %v118 = vadd.f32 0.0, %v117
    %v119 = vpop.f32.mrb[0].mxu0
    %v120 = vadd.f32 0.0, %v119
    %121 = vdwg.mxu0
    %122 = vmatprep.subr.mxu0 0.0
    %123 = vmatpush1.msra.mxu0 %v43
    %124 = vmatprep.subr.mxu0 0.0
    %125 = vmatpush1.msra.mxu0 %v46
    %126 = vmatprep.subr.mxu0 0.0
    %127 = vmatpush1.msra.mxu0 0.0
    %128 = vmatprep.subr.mxu0 0.0
    %129 = vmatpush1.msra.mxu0 0.0
    %130 = vmatprep.subr.mxu0 0.0
    %131 = vmatpush1.msra.mxu0 0.0
    %132 = vmatprep.subr.mxu0 0.0
    %133 = vmatpush1.msra.mxu0 0.0
    %134 = vmatprep.subr.mxu0 0.0
    %135 = vmatpush1.msra.mxu0 0.0
    %136 = vmatprep.subr.mxu0 0.0
    %137 = vmatpush1.msra.mxu0 0.0
    %138 = vmatprep.subr.mxu0 0.0
    %139 = vmatpush1.msra.mxu0 0.0
    %140 = vmatprep.subr.mxu0 0.0
    %141 = vmatpush1.msra.mxu0 0.0
    %142 = vmatprep.subr.mxu0 0.0
    %143 = vmatpush1.msra.mxu0 0.0
    %144 = vmatprep.subr.mxu0 0.0
    %145 = vmatpush1.msra.mxu0 0.0
    %146 = vmatprep.subr.mxu0 0.0
    %147 = vmatpush1.msra.mxu0 0.0
    %148 = vmatprep.subr.mxu0 0.0
    %149 = vmatpush1.msra.mxu0 0.0
    %150 = vmatprep.subr.mxu0 0.0
    %151 = vmatpush1.msra.mxu0 0.0
    %152 = vmatprep.subr.mxu0 0.0
    %153 = vmatpush1.msra.mxu0 0.0
    %154 = vmatprep.subr.mxu0 0.0
    %155 = vmatpush1.msra.mxu0 0.0
    %156 = vmatprep.subr.mxu0 0.0
    %157 = vmatpush1.msra.mxu0 0.0
    %158 = vmatprep.subr.mxu0 0.0
    %159 = vmatpush1.msra.mxu0 0.0
    %160 = vmatprep.subr.mxu0 0.0
    %161 = vmatpush1.msra.mxu0 0.0
    %162 = vmatprep.subr.mxu0 0.0
    %163 = vmatpush1.msra.mxu0 0.0
    %164 = vmatprep.subr.mxu0 0.0
    %165 = vmatpush1.msra.mxu0 0.0
    %166 = vmatprep.subr.mxu0 0.0
    %167 = vmatpush1.msra.mxu0 0.0
    %168 = vmatprep.subr.mxu0 0.0
    %169 = vmatpush1.msra.mxu0 0.0
    %170 = vmatprep.subr.mxu0 0.0
    %171 = vmatpush1.msra.mxu0 0.0
    %172 = vmatprep.subr.mxu0 0.0
    %173 = vmatpush1.msra.mxu0 0.0
    %174 = vmatprep.subr.mxu0 0.0
    %175 = vmatpush1.msra.mxu0 0.0
    %176 = vmatprep.subr.mxu0 0.0
    %177 = vmatpush1.msra.mxu0 0.0
    %178 = vmatprep.subr.mxu0 0.0
    %179 = vmatpush1.msra.mxu0 0.0
    %180 = vmatprep.subr.mxu0 0.0
    %181 = vmatpush1.msra.mxu0 0.0
    %182 = vmatprep.subr.mxu0 0.0
    %183 = vmatpush1.msra.mxu0 0.0
    %184 = vmatprep.subr.mxu0 0.0
    %185 = vmatpush1.msra.mxu0 0.0
    %186 = vmatprep.mubr.f32.mxu0 0.0
    %187 = vmatmul.mubr.f32.gmra.mrb[0].mxu0 %v49
    %v188 = vpop.f32.mrb[0].mxu0
    %v189 = vadd.f32 0.0, %v188
    %v190 = vpop.f32.mrb[0].mxu0
    %191 = vdwg.mxu0
    %s192 = scalar_lea.vmem [#allocation5], 49
    %v193 = vld [vmem:[%s192] ss:$8 sm:$0x7]
    %s194 = scalar_lea.vmem [#allocation5], 50
    %v195 = vld [vmem:[%s194] ss:$8 sm:$0x7]
    %v197 = vlaneseq
    %v198 = vshrl.u32 %v197, 7
    %v199 = vsub.s32 0, %v198
    %v200 = vrot.slane %v193, %v199
    %v201 = vlaneseq
    %v202 = vshrl.u32 %v201, 7
    %v203 = vsub.s32 1, %v202
    %v204 = vrot.slane %v193, %v203
    %v205 = vlaneseq
    %v206 = vshrl.u32 %v205, 7
    %v207 = vsub.s32 2, %v206
    %v208 = vrot.slane %v193, %v207
    %v212 = vadd.f32 %v200, %v118
    %v213 = vadd.f32 %v204, %v120
    %v214 = vadd.f32 %v208, %v189
    %v216 = vlaneseq
    %v217 = vshrl.u32 %v216, 7
    %v218 = vsub.s32 0, %v217
    %v219 = vrot.slane %v195, %v218
    %v220 = vlaneseq
    %v221 = vshrl.u32 %v220, 7
    %v222 = vsub.s32 1, %v221
    %v223 = vrot.slane %v195, %v222
    %v224 = vlaneseq
    %v225 = vshrl.u32 %v224, 7
    %v226 = vsub.s32 2, %v225
    %v227 = vrot.slane %v195, %v226
    %v231 = vsub.f32 %v219, %v212
    %v232 = vsub.f32 %v223, %v213
    %v233 = vsub.f32 %v227, %v214
    %v234 = vmul.f32 %v231, %v231
    %v235 = vmul.f32 %v232, %v232
    %v236 = vmul.f32 %v233, %v233
    %v237 = vadd.f32 %v234, %v235
    %v238 = vadd.f32 %v237, %v236
    %v239 = vrsqrt.pop %v238
    %v240 = vmul.f32 %v238, %v239
    %vm241 = vcmp.eq.f32.partialorder %v238, inf
    %v242 = vsel %vm241, %v238, %v240
    %vm243 = vcmp.eq.f32.partialorder %v238, 0.0
    %v244 = vand.u32 %v238, 2147483648
    %v245 = vsel %vm243, %v244, %v242
    %246 = vadd.xlane.f32.xlu0 %v245
    %v247 = vpop.xlane.xlu0 %246
    %v248 = vmul.f32 %v38, %v38
    %v249 = vsel %vm47, %v248, 0.0
    %250 = vadd.xlane.f32.xlu0 %v249
    %v251 = vpop.xlane.xlu0 %250
    %v252 = vrsqrt.pop %v251
    %v253 = vmul.f32 %v251, %v252
    %vm254 = vcmp.eq.f32.partialorder %v251, inf
    %v255 = vsel %vm254, %v251, %v253
    %vm256 = vcmp.eq.f32.partialorder %v251, 0.0
    %v257 = vand.u32 %v251, 2147483648
    %v258 = vsel %vm256, %v257, %v255
    %v259 = vsub.f32 %v258, 1.0
    %v260 = vand.u32 2147483647, %v259
    %v261 = vmul.f32 %v260, 0.5
    %v262 = vadd.f32 %v247, %v261
    %263 = vst [vmem:[#allocation7] sm:$0xff] %v262
    // Predicated region
    $region18: #{tpu_custom_call.1} parent=1 // pred_check
      _
    $region19: #{tpu_custom_call.1} parent=1 // pred_check_branch
      %265 = sbr.rel (0) target = $region21
    $region20: #{tpu_custom_call.1} parent=1 // pred_region
      %s267 = ssub.s32 128, 128
      %268 = vsyncadd [#allocation4], %s267
      %s270 = sshll.u32 [#allocation7], 4
      %s271 = int_to_ptr.vmem [resolvable:$true] %s270
      %273 = dma.vmem_to_hbm [thread:$0]  %s271, 128, %s2, [#allocation4]
    $region21: #{tpu_custom_call.1} parent=1 // pred_fallthru
      _
    // Predicated region
    $region22: #{tpu_custom_call.1} parent=1 // pred_check
      _
    $region23: #{tpu_custom_call.1} parent=1 // pred_check_branch
      %275 = sbr.rel (0) target = $region25
    $region24: #{tpu_custom_call.1} parent=1 // pred_region
      %276 = dma.done [#allocation4], 128
    $region25: #{tpu_custom_call.1} parent=1 // pred_fallthru
      _
    %277 = vsyncpa [#allocation3], 1
    %278 = vsyncpa [#allocation6], 1
    %279 = vsyncpa [#allocation4], 1

</llo_original>
